<compile_context>
chip_gen: v5e
topology: v5e:2x2
jax: 0.10.0
libtpu: 0.0.40
codegen_flags: <defaults>
</compile_context>

<pallas_src>
import functools

import jax
import jax.numpy as jnp
from jax.experimental import pallas as pl
from jax.experimental.pallas import tpu as pltpu


HIDDEN = 64
ALIGN = 16    # bf16 sublane packing -> batch tiles must be multiples of 16
LANE = 128


def _round_up(n, m):
    return ((n + m - 1) // m) * m


def _round_down_pos(n, m):
    return max(m, (n // m) * m)


def _mlp_kernel(x_ref, w1_ref, b1_ref, w2_ref, b2_ref, w3_ref, b3_ref, o_ref,
                *, sigmoid_col):
    x = x_ref[...]                                                   # [TB, d_in] bf16

    # fc1 + relu  (bf16 operands, f32 MXU accumulation)
    h1 = jnp.dot(x, w1_ref[...], preferred_element_type=jnp.float32) + b1_ref[...]
    h1 = jnp.maximum(h1, 0.0).astype(jnp.bfloat16)                   # [TB, 64]

    # fc2 + relu
    h2 = jnp.dot(h1, w2_ref[...], preferred_element_type=jnp.float32) + b2_ref[...]
    h2 = jnp.maximum(h2, 0.0).astype(jnp.bfloat16)                   # [TB, 64]

    # fused head: columns [0, out-2] = fc3 (linear), column out-1 = sigmoid(fc4)
    z = jnp.dot(h2, w3_ref[...], preferred_element_type=jnp.float32) + b3_ref[...]
    col = jax.lax.broadcasted_iota(jnp.int32, z.shape, dimension=1)
    o_ref[...] = jnp.where(col == sigmoid_col, jax.nn.sigmoid(z), z)  # [TB, d_out]


def _choose_batch_tile(batch, block_b, d_in, d_out_store):
    """Pick a 16-aligned batch tile and padded batch size.

    VMEM budget uses *lane-padded* per-row footprints for the two pipelined
    (double-buffered) arrays:
        x tile  : 2 bufs * tb * round_up(d_in,128)       * 2 B (bf16)
        out tile: 2 bufs * tb * round_up(d_out_store,128) * 4 B (f32)
    Target ~12 MiB so the tiles fit even v5e's 16 MiB default scoped VMEM and
    leave ample headroom inside v7x's 32 MiB scoped / 64 MiB physical VMEM.
    """
    per_row = 2 * _round_up(d_in, LANE) * 2 + 2 * _round_up(d_out_store, LANE) * 4
    vmem_cap = _round_down_pos((12 * 1024 * 1024) // per_row, ALIGN)

    b_min = _round_up(batch, ALIGN)
    tb = min(_round_down_pos(block_b, ALIGN), vmem_cap, b_min)

    # v7x has 2 TensorCores that shard the "parallel" grid axis: ensure >= 2
    # grid steps whenever the batch is big enough to split.
    if tb >= b_min and b_min >= 2 * ALIGN:
        tb = _round_up(pl.cdiv(b_min, 2), ALIGN)

    padded_b = _round_up(b_min, tb)
    return tb, padded_b


@functools.partial(jax.jit, static_argnames=("block_b",))
def neural_network_forward(x, params, *, block_b=4096):
    """x: [B, input_dim] float32; params: dict of PyTorch-shaped weights."""
    B, d_in = x.shape

    # ---- wrapper-side weight prep (trace time, free) ----
    # Fuse the two heads into one [output_dim, 64] weight / [output_dim] bias.
    head_w = jnp.concatenate([params["w3"], params["w4"]], axis=0)    # [out, 64]
    head_b = jnp.concatenate([params["b3"], params["b4"]], axis=0)    # [out]
    output_dim = head_w.shape[0]

    # Lane-dense store path for wide heads: pad columns to a multiple of 128.
    d_out_store = output_dim if output_dim <= LANE else _round_up(output_dim, LANE)
    if d_out_store != output_dim:
        head_w = jnp.pad(head_w, ((0, d_out_store - output_dim), (0, 0)))
        head_b = jnp.pad(head_b, ((0, d_out_store - output_dim),))

    # bf16 inputs/weights (f32 accumulation in-kernel) halve the dominant HBM
    # traffic; pre-transpose to [in, out]; biases stay f32, shaped (1, N).
    w1 = params["w1"].T.astype(jnp.bfloat16)            # [d_in, 64]
    w2 = params["w2"].T.astype(jnp.bfloat16)            # [64, 64]
    w3 = head_w.T.astype(jnp.bfloat16)                  # [64, d_out_store]
    b1 = params["b1"].reshape(1, HIDDEN).astype(jnp.float32)
    b2 = params["b2"].reshape(1, HIDDEN).astype(jnp.float32)
    b3 = head_b.reshape(1, d_out_store).astype(jnp.float32)
    x = x.astype(jnp.bfloat16)

    # ---- batch tiling ----
    tb, padded_b = _choose_batch_tile(B, block_b, d_in, d_out_store)
    if padded_b != B:
        x = jnp.pad(x, ((0, padded_b - B), (0, 0)))

    grid = (padded_b // tb,)
    const = lambda i: (0, 0)                 # resident weights / biases

    kernel = functools.partial(_mlp_kernel, sigmoid_col=output_dim - 1)

    out = pl.pallas_call(
        kernel,
        out_shape=jax.ShapeDtypeStruct((padded_b, d_out_store), jnp.float32),
        grid=grid,
        in_specs=[
            pl.BlockSpec((tb, d_in), lambda i: (i, 0)),         # x tile (bf16)
            # Resident (constant-index) weights/biases; < 64 KiB total even
            # double-buffered, so default buffering is kept for robustness.
            pl.BlockSpec((d_in, HIDDEN), const),                # w1
            pl.BlockSpec((1, HIDDEN), const),                   # b1
            pl.BlockSpec((HIDDEN, HIDDEN), const),              # w2
            pl.BlockSpec((1, HIDDEN), const),                   # b2
            pl.BlockSpec((HIDDEN, d_out_store), const),         # fused head w
            pl.BlockSpec((1, d_out_store), const),              # fused head b
        ],
        out_specs=pl.BlockSpec((tb, d_out_store), lambda i: (i, 0)),
        compiler_params=pltpu.CompilerParams(
            dimension_semantics=("parallel",),
            vmem_limit_bytes=32 * 1024 * 1024,
        ),
    )(x, w1, b1, w2, b2, w3, b3)

    if padded_b != B or d_out_store != output_dim:
        out = out[:B, :output_dim]
    return out


def init_params(key, input_dim, output_dim):
    """Deterministic PyTorch-Linear-style init (uniform in +-1/sqrt(fan_in))."""
    def linear(key, fan_out, fan_in):
        kw, kb = jax.random.split(key)
        bound = 1.0 / jnp.sqrt(fan_in)
        w = jax.random.uniform(kw, (fan_out, fan_in), jnp.float32, -bound, bound)
        b = jax.random.uniform(kb, (fan_out,), jnp.float32, -bound, bound)
        return w, b

    k1, k2, k3, k4 = jax.random.split(key, 4)
    w1, b1 = linear(k1, HIDDEN, input_dim)
    w2, b2 = linear(k2, HIDDEN, HIDDEN)
    w3, b3 = linear(k3, output_dim - 1, HIDDEN)
    w4, b4 = linear(k4, 1, HIDDEN)
    return {"w1": w1, "b1": b1, "w2": w2, "b2": b2,
            "w3": w3, "b3": b3, "w4": w4, "b4": b4}


def reference_forward(x, p, *, match_kernel_precision=False):
    """Pure-JAX reference. If match_kernel_precision, mimic the kernel's bf16
    inputs/weights with f32 accumulation; otherwise full f32 (module semantics)."""
    cast = (lambda a: a.astype(jnp.bfloat16)) if match_kernel_precision else (lambda a: a)
    h1 = jnp.maximum(jnp.dot(cast(x), cast(p["w1"].T),
                             preferred_element_type=jnp.float32) + p["b1"], 0.0)
    h1 = cast(h1)
    h2 = jnp.maximum(jnp.dot(h1, cast(p["w2"].T),
                             preferred_element_type=jnp.float32) + p["b2"], 0.0)
    h2 = cast(h2)
    out1 = jnp.dot(h2, cast(p["w3"].T), preferred_element_type=jnp.float32) + p["b3"]
    out2 = jax.nn.sigmoid(
        jnp.dot(h2, cast(p["w4"].T), preferred_element_type=jnp.float32) + p["b4"])
    return jnp.concatenate([out1, out2], axis=1)


if __name__ == "__main__":
    key = jax.random.PRNGKey(0)
    kx, kp, kx2 = jax.random.split(key, 3)

    batch, input_dim, output_dim = 8, 16, 8
    params = init_params(kp, input_dim, output_dim)

    # Small-shape check (single grid step).
    x = jax.random.normal(kx, (batch, input_dim), jnp.float32)
    out = neural_network_forward(x, params)
    jax.block_until_ready(out)
    assert out.shape == (batch, output_dim)
    ref_match = reference_forward(x, params, match_kernel_precision=True)
    ref_f32 = reference_forward(x, params, match_kernel_precision=False)
    assert jnp.allclose(out, ref_match, atol=2e-3, rtol=2e-3), \
        "mismatch vs bf16-matched JAX reference (small)"
    assert jnp.allclose(out, ref_f32, atol=1e-1, rtol=1e-1), \
        "mismatch vs f32 JAX reference (small)"

    # Non-multiple batch: exercises padding and a 2-step parallel grid (so both
    # v7x TensorCores get work).
    x2 = jax.random.normal(kx2, (300, input_dim), jnp.float32)
    out2 = neural_network_forward(x2, params)
    jax.block_until_ready(out2)
    assert out2.shape == (300, output_dim)
    ref2 = reference_forward(x2, params, match_kernel_precision=True)
    assert jnp.allclose(out2, ref2, atol=2e-3, rtol=2e-3), \
        "mismatch vs bf16-matched JAX reference (tiled)"

    print("KERNEL_OK")
</pallas_src>

<mosaic_0001>
module attributes {stable_mosaic.version = 11 : i64} {
  func.func @_mlp_kernel(%arg0: i32, %arg1: memref<16x16xbf16, #tpu.memory_space<vmem>>, %arg2: memref<16x64xbf16, #tpu.memory_space<vmem>>, %arg3: memref<1x64xf32, #tpu.memory_space<vmem>>, %arg4: memref<64x64xbf16, #tpu.memory_space<vmem>>, %arg5: memref<1x64xf32, #tpu.memory_space<vmem>>, %arg6: memref<64x8xbf16, #tpu.memory_space<vmem>>, %arg7: memref<1x8xf32, #tpu.memory_space<vmem>>, %arg8: memref<16x8xf32, #tpu.memory_space<vmem>>) attributes {dimension_semantics = [#tpu.dimension_semantics<parallel>], iteration_bounds = array<i64: 1>, scalar_prefetch = 0 : i64, scratch_operands = 0 : i64, tpu.core_type = #tpu.core_type<tc>, window_params = [{transform_indices = @transform_0, window_bounds = array<i64: 16, 16>}, {pipeline_mode = #tpu.pipeline_mode<synchronous>, transform_indices = @transform_1, window_bounds = array<i64: 16, 64>}, {pipeline_mode = #tpu.pipeline_mode<synchronous>, transform_indices = @transform_2, window_bounds = array<i64: 1, 64>}, {pipeline_mode = #tpu.pipeline_mode<synchronous>, transform_indices = @transform_3, window_bounds = array<i64: 64, 64>}, {pipeline_mode = #tpu.pipeline_mode<synchronous>, transform_indices = @transform_4, window_bounds = array<i64: 1, 64>}, {pipeline_mode = #tpu.pipeline_mode<synchronous>, transform_indices = @transform_5, window_bounds = array<i64: 64, 8>}, {pipeline_mode = #tpu.pipeline_mode<synchronous>, transform_indices = @transform_6, window_bounds = array<i64: 1, 8>}, {transform_indices = @transform_7, window_bounds = array<i64: 16, 8>}]} {
    %c0 = arith.constant 0 : index
    %c0_0 = arith.constant 0 : index
    %0 = vector.load %arg1[%c0, %c0_0] : memref<16x16xbf16, #tpu.memory_space<vmem>>, vector<16x16xbf16>
    %c0_1 = arith.constant 0 : index
    %c0_2 = arith.constant 0 : index
    %1 = vector.load %arg2[%c0_1, %c0_2] : memref<16x64xbf16, #tpu.memory_space<vmem>>, vector<16x64xbf16>
    %cst = arith.constant dense<0.000000e+00> : vector<16x64xf32>
    %2 = tpu.matmul %0, %1, %cst {dimension_numbers = #tpu.dot_dimension_numbers<[1], [0], [0], [1], [0, 0, 1, 1], [], []>} : vector<16x16xbf16>, vector<16x64xbf16>, vector<16x64xf32> -> vector<16x64xf32>
    %c0_3 = arith.constant 0 : index
    %c0_4 = arith.constant 0 : index
    %3 = vector.load %arg3[%c0_3, %c0_4] : memref<1x64xf32, #tpu.memory_space<vmem>>, vector<1x64xf32>
    %4 = vector.broadcast %3 : vector<1x64xf32> to vector<16x64xf32>
    %5 = arith.addf %2, %4 : vector<16x64xf32>
    %cst_5 = arith.constant 0.000000e+00 : f32
    %6 = vector.broadcast %cst_5 : f32 to vector<16x64xf32>
    %7 = arith.maximumf %5, %6 : vector<16x64xf32>
    %8 = arith.truncf %7 : vector<16x64xf32> to vector<16x64xbf16>
    %c0_6 = arith.constant 0 : index
    %c0_7 = arith.constant 0 : index
    %9 = vector.load %arg4[%c0_6, %c0_7] : memref<64x64xbf16, #tpu.memory_space<vmem>>, vector<64x64xbf16>
    %cst_8 = arith.constant dense<0.000000e+00> : vector<16x64xf32>
    %10 = tpu.matmul %8, %9, %cst_8 {dimension_numbers = #tpu.dot_dimension_numbers<[1], [0], [0], [1], [0, 0, 1, 1], [], []>} : vector<16x64xbf16>, vector<64x64xbf16>, vector<16x64xf32> -> vector<16x64xf32>
    %c0_9 = arith.constant 0 : index
    %c0_10 = arith.constant 0 : index
    %11 = vector.load %arg5[%c0_9, %c0_10] : memref<1x64xf32, #tpu.memory_space<vmem>>, vector<1x64xf32>
    %12 = vector.broadcast %11 : vector<1x64xf32> to vector<16x64xf32>
    %13 = arith.addf %10, %12 : vector<16x64xf32>
    %cst_11 = arith.constant 0.000000e+00 : f32
    %14 = vector.broadcast %cst_11 : f32 to vector<16x64xf32>
    %15 = arith.maximumf %13, %14 : vector<16x64xf32>
    %16 = arith.truncf %15 : vector<16x64xf32> to vector<16x64xbf16>
    %c0_12 = arith.constant 0 : index
    %c0_13 = arith.constant 0 : index
    %17 = vector.load %arg6[%c0_12, %c0_13] : memref<64x8xbf16, #tpu.memory_space<vmem>>, vector<64x8xbf16>
    %cst_14 = arith.constant dense<0.000000e+00> : vector<16x8xf32>
    %18 = tpu.matmul %16, %17, %cst_14 {dimension_numbers = #tpu.dot_dimension_numbers<[1], [0], [0], [1], [0, 0, 1, 1], [], []>} : vector<16x64xbf16>, vector<64x8xbf16>, vector<16x8xf32> -> vector<16x8xf32>
    %c0_15 = arith.constant 0 : index
    %c0_16 = arith.constant 0 : index
    %19 = vector.load %arg7[%c0_15, %c0_16] : memref<1x8xf32, #tpu.memory_space<vmem>>, vector<1x8xf32>
    %20 = vector.broadcast %19 : vector<1x8xf32> to vector<16x8xf32>
    %21 = arith.addf %18, %20 : vector<16x8xf32>
    %22 = tpu.iota {dimensions = array<i32: 1>} : vector<16x8xi32>
    %c7_i32 = arith.constant 7 : i32
    %23 = vector.broadcast %c7_i32 : i32 to vector<16x8xi32>
    %24 = arith.cmpi eq, %22, %23 : vector<16x8xi32>
    %25 = arith.negf %21 : vector<16x8xf32>
    %26 = math.exp %25 : vector<16x8xf32>
    %cst_17 = arith.constant 1.000000e+00 : f32
    %27 = vector.broadcast %cst_17 : f32 to vector<16x8xf32>
    %28 = arith.addf %27, %26 : vector<16x8xf32>
    %29 = arith.divf %27, %28 : vector<16x8xf32>
    %30 = arith.select %24, %29, %21 : vector<16x8xi1>, vector<16x8xf32>
    %c0_18 = arith.constant 0 : index
    %c0_19 = arith.constant 0 : index
    %31 = vector.load %arg8[%c0_18, %c0_19] : memref<16x8xf32, #tpu.memory_space<vmem>>, vector<16x8xf32>
    tpu.vector_store %arg8[%c0_18, %c0_19], %30 {strides = array<i32>} : memref<16x8xf32, #tpu.memory_space<vmem>>, vector<16x8xf32>,
    return
  }
  func.func @transform_0(%arg0: i32) -> (i32, i32) {
    %c0_i32 = arith.constant 0 : i32
    %c0_i32_0 = arith.constant 0 : i32
    return %arg0, %c0_i32 : i32, i32
  }
  func.func @transform_1(%arg0: i32) -> (i32, i32) {
    %c0_i32 = arith.constant 0 : i32
    %c0_i32_0 = arith.constant 0 : i32
    %c0_i32_1 = arith.constant 0 : i32
    return %c0_i32, %c0_i32_0 : i32, i32
  }
  func.func @transform_2(%arg0: i32) -> (i32, i32) {
    %c0_i32 = arith.constant 0 : i32
    %c0_i32_0 = arith.constant 0 : i32
    %c0_i32_1 = arith.constant 0 : i32
    return %c0_i32, %c0_i32_0 : i32, i32
  }
  func.func @transform_3(%arg0: i32) -> (i32, i32) {
    %c0_i32 = arith.constant 0 : i32
    %c0_i32_0 = arith.constant 0 : i32
    %c0_i32_1 = arith.constant 0 : i32
    return %c0_i32, %c0_i32_0 : i32, i32
  }
  func.func @transform_4(%arg0: i32) -> (i32, i32) {
    %c0_i32 = arith.constant 0 : i32
    %c0_i32_0 = arith.constant 0 : i32
    %c0_i32_1 = arith.constant 0 : i32
    return %c0_i32, %c0_i32_0 : i32, i32
  }
  func.func @transform_5(%arg0: i32) -> (i32, i32) {
    %c0_i32 = arith.constant 0 : i32
    %c0_i32_0 = arith.constant 0 : i32
    %c0_i32_1 = arith.constant 0 : i32
    return %c0_i32, %c0_i32_0 : i32, i32
  }
  func.func @transform_6(%arg0: i32) -> (i32, i32) {
    %c0_i32 = arith.constant 0 : i32
    %c0_i32_0 = arith.constant 0 : i32
    %c0_i32_1 = arith.constant 0 : i32
    return %c0_i32, %c0_i32_0 : i32, i32
  }
  func.func @transform_7(%arg0: i32) -> (i32, i32) {
    %c0_i32 = arith.constant 0 : i32
    %c0_i32_0 = arith.constant 0 : i32
    return %arg0, %c0_i32 : i32, i32
  }
}

</mosaic_0001>

<llo_original>
// kernel: neural_network_forward.1
$region0: #{neural_network_forward.1}
  #allocation0 [shape = 'u32[]', space=smem, size = 0x4, offset = 0x4, fixed_abs, tag = 'smem constant byte address 0x4 - core index']
  #allocation1 [shape = 'u32[72,128]{1,0:T(1,128)}', space=vmem, size = 0x9000, scoped, tag = 'internal scratch']
  %s0 = inlined_call_operand.vmem [shape: bf16[16,16], index: 0, kind: input, shape index: {}]
  %s1 = inlined_call_operand.vmem [shape: bf16[16,64], index: 1, kind: input, shape index: {}]
  %s2 = inlined_call_operand.vmem [shape: f32[1,64], index: 2, kind: input, shape index: {}]
  %s3 = inlined_call_operand.vmem [shape: bf16[64,64], index: 3, kind: input, shape index: {}]
  %s4 = inlined_call_operand.vmem [shape: f32[1,64], index: 4, kind: input, shape index: {}]
  %s5 = inlined_call_operand.vmem [shape: bf16[64,8], index: 5, kind: input, shape index: {}]
  %s6 = inlined_call_operand.vmem [shape: f32[1,8], index: 6, kind: input, shape index: {}]
  %s7 = inlined_call_operand.vmem [shape: f32[16,8], index: 7, kind: output, shape index: {}]
  %s8 = sld [smem:[#allocation0]]
  $region38: #{neural_network_forward.1} parent=0
    _
  %s10 = ssub.s32 1, %s8
  %s11 = scalar_select 0, %s10, %s8
  // Predicated region
  $region2: #{neural_network_forward.1} parent=0 // pred_check
    _
  $region3: #{neural_network_forward.1} parent=0 // pred_check_branch
    %13 = sbr.rel (0) target = $region5
  $region4: #{neural_network_forward.1} parent=0 // pred_region
    _
  $region5: #{neural_network_forward.1} parent=0 // pred_fallthru
    _
  // Predicated region
  $region6: #{neural_network_forward.1} parent=0 // pred_check
    _
  $region7: #{neural_network_forward.1} parent=0 // pred_check_branch
    %15 = sbr.rel (0) target = $region9
  $region8: #{neural_network_forward.1} parent=0 // pred_region
    _
  $region9: #{neural_network_forward.1} parent=0 // pred_fallthru
    _
  // Predicated region
  $region10: #{neural_network_forward.1} parent=0 // pred_check
    _
  $region11: #{neural_network_forward.1} parent=0 // pred_check_branch
    %17 = sbr.rel (0) target = $region13
  $region12: #{neural_network_forward.1} parent=0 // pred_region
    _
  $region13: #{neural_network_forward.1} parent=0 // pred_fallthru
    _
  // Predicated region
  $region14: #{neural_network_forward.1} parent=0 // pred_check
    _
  $region15: #{neural_network_forward.1} parent=0 // pred_check_branch
    %19 = sbr.rel (0) target = $region17
  $region16: #{neural_network_forward.1} parent=0 // pred_region
    _
  $region17: #{neural_network_forward.1} parent=0 // pred_fallthru
    _
  // Predicated region
  $region18: #{neural_network_forward.1} parent=0 // pred_check
    _
  $region19: #{neural_network_forward.1} parent=0 // pred_check_branch
    %21 = sbr.rel (0) target = $region21
  $region20: #{neural_network_forward.1} parent=0 // pred_region
    _
  $region21: #{neural_network_forward.1} parent=0 // pred_fallthru
    _
  // Predicated region
  $region22: #{neural_network_forward.1} parent=0 // pred_check
    _
  $region23: #{neural_network_forward.1} parent=0 // pred_check_branch
    %23 = sbr.rel (0) target = $region25
  $region24: #{neural_network_forward.1} parent=0 // pred_region
    _
  $region25: #{neural_network_forward.1} parent=0 // pred_fallthru
    _
  // Predicated region
  $region26: #{neural_network_forward.1} parent=0 // pred_check
    _
  $region27: #{neural_network_forward.1} parent=0 // pred_check_branch
    %25 = sbr.rel (0) target = $region29
  $region28: #{neural_network_forward.1} parent=0 // pred_region
    _
  $region29: #{neural_network_forward.1} parent=0 // pred_fallthru
    _
  %v27 = vld [vmem:[%s0] sm:$0xf]
  %v28 = vld [vmem:[%s0 + $0x4] sm:$0xf]
  %v29 = vld [vmem:[%s1] sm:$0xf]
  %v30 = vld [vmem:[%s1 + $0x4] sm:$0xf]
  %v31 = vld [vmem:[%s2] sm:$0x1]
  %v33 = vperm.slane %v31, 0
  %v37 = vunpack.c.l.b16 %v27
  %v38 = vunpack.c.l.b16 %v28
  %v39 = vpack.c.b16 %v38, %v37
  %v42 = vunpack.c.l.b16 %v29
  %v43 = vunpack.c.l.b16 %v30
  %v44 = vpack.c.b16 %v43, %v42
  %vm46 = vcmask 130048
  %v48 = vsel %vm46, %v39, 0
  %50 = vmatpush.bf16.msra.mxu0 0
  %51 = vmatpush.bf16.msra.mxu0 0
  %52 = vmatpush.bf16.msra.mxu0 0
  %53 = vmatpush.bf16.msra.mxu0 0
  %54 = vmatpush.bf16.msra.mxu0 0
  %55 = vmatpush.bf16.msra.mxu0 0
  %56 = vmatpush.bf16.msra.mxu0 0
  %57 = vmatpush.bf16.msra.mxu0 %v44
  %58 = vmatmul.bf16.gmra.mxu0 %v48
  %v59 = vpop.f32.mrf.mxu0
  %v60 = vadd.f32 %v33, %v59
  %v61 = vpop.f32.mrf.mxu0
  %v62 = vadd.f32 %v33, %v61
  %63 = vdwg.mxu0
  %v64 = vmax.f32 %v60, 0.0
  %v65 = vmax.f32 %v62, 0.0
  %v66 = vpack.c.bf16 %v65, %v64
  %v67 = vld [vmem:[%s3] sm:$0xf]
  %v68 = vld [vmem:[%s3 + $0x4] sm:$0xf]
  %v69 = vld [vmem:[%s3 + $0x8] sm:$0xf]
  %v70 = vld [vmem:[%s3 + $0xc] sm:$0xf]
  %v71 = vld [vmem:[%s3 + $0x10] sm:$0xf]
  %v72 = vld [vmem:[%s3 + $0x14] sm:$0xf]
  %v73 = vld [vmem:[%s3 + $0x18] sm:$0xf]
  %v74 = vld [vmem:[%s3 + $0x1c] sm:$0xf]
  %v75 = vld [vmem:[%s4] sm:$0x1]
  %v77 = vperm.slane %v75, 0
  %v87 = vunpack.c.l.b16 %v67
  %v88 = vunpack.c.l.b16 %v68
  %v89 = vunpack.c.l.b16 %v69
  %v90 = vunpack.c.l.b16 %v70
  %v91 = vunpack.c.l.b16 %v71
  %v92 = vunpack.c.l.b16 %v72
  %v93 = vunpack.c.l.b16 %v73
  %v94 = vunpack.c.l.b16 %v74
  %v95 = vpack.c.b16 %v88, %v87
  %v96 = vpack.c.b16 %v90, %v89
  %v97 = vpack.c.b16 %v92, %v91
  %v98 = vpack.c.b16 %v94, %v93
  %vm103 = vcmask 523264
  %v105 = vsel %vm103, %v66, 0
  %107 = vmatpush.bf16.msra.mxu0 0
  %108 = vmatpush.bf16.msra.mxu0 0
  %109 = vmatpush.bf16.msra.mxu0 0
  %110 = vmatpush.bf16.msra.mxu0 0
  %111 = vmatpush.bf16.msra.mxu0 %v98
  %112 = vmatpush.bf16.msra.mxu0 %v97
  %113 = vmatpush.bf16.msra.mxu0 %v96
  %114 = vmatpush.bf16.msra.mxu0 %v95
  %115 = vmatmul.bf16.gmra.mxu0 %v105
  %v116 = vpop.f32.mrf.mxu0
  %v117 = vadd.f32 %v77, %v116
  %v118 = vpop.f32.mrf.mxu0
  %v119 = vadd.f32 %v77, %v118
  %120 = vdwg.mxu0
  %v121 = vmax.f32 %v117, 0.0
  %v122 = vmax.f32 %v119, 0.0
  %v123 = vpack.c.bf16 %v122, %v121
  %v124 = vld [vmem:[%s5] sm:$0xf]
  %v125 = vld [vmem:[%s5 + $0x4] sm:$0xf]
  %v126 = vld [vmem:[%s5 + $0x8] sm:$0xf]
  %v127 = vld [vmem:[%s5 + $0xc] sm:$0xf]
  %v128 = vld [vmem:[%s5 + $0x10] sm:$0xf]
  %v129 = vld [vmem:[%s5 + $0x14] sm:$0xf]
  %v130 = vld [vmem:[%s5 + $0x18] sm:$0xf]
  %v131 = vld [vmem:[%s5 + $0x1c] sm:$0xf]
  %v132 = vld [vmem:[%s6] sm:$0x1]
  %v134 = vperm.slane %v132, 0
  %v144 = vunpack.c.l.b16 %v124
  %v145 = vunpack.c.l.b16 %v125
  %v146 = vunpack.c.l.b16 %v126
  %v147 = vunpack.c.l.b16 %v127
  %v148 = vunpack.c.l.b16 %v128
  %v149 = vunpack.c.l.b16 %v129
  %v150 = vunpack.c.l.b16 %v130
  %v151 = vunpack.c.l.b16 %v131
  %v152 = vpack.c.b16 %v145, %v144
  %v153 = vpack.c.b16 %v147, %v146
  %v154 = vpack.c.b16 %v149, %v148
  %v155 = vpack.c.b16 %v151, %v150
  %v161 = vsel %vm103, %v123, 0
  %163 = vmatpush.bf16.msra.mxu0 0
  %164 = vmatpush.bf16.msra.mxu0 0
  %165 = vmatpush.bf16.msra.mxu0 0
  %166 = vmatpush.bf16.msra.mxu0 0
  %167 = vmatpush.bf16.msra.mxu0 %v155
  %168 = vmatpush.bf16.msra.mxu0 %v154
  %169 = vmatpush.bf16.msra.mxu0 %v153
  %170 = vmatpush.bf16.msra.mxu0 %v152
  %171 = vmatmul.bf16.gmra.mxu0 %v161
  %v172 = vpop.f32.mrf.mxu0
  %v173 = vadd.f32 %v134, %v172
  %v174 = vpop.f32.mrf.mxu0
  %v175 = vadd.f32 %v134, %v174
  %176 = vdwg.mxu0
  %v177 = vlaneseq
  %v178 = vand.u32 %v177, 127
  %vm179 = vcmp.eq.s32.totalorder %v178, 7
  %v180 = vxor.u32 %v173, 2147483648
  %v181 = vxor.u32 %v175, 2147483648
  %v182 = vmul.f32 %v180, 1.442695
  %v183 = vpow.pop %v182
  %v184 = vmul.f32 %v181, 1.442695
  %v185 = vpow.pop %v184
  %v186 = vadd.f32 %v183, 1.0
  %v187 = vadd.f32 %v185, 1.0
  %v188 = vrcp.pop %v186
  %v189 = vmul.f32 %v186, %v188
  %v190 = vsub.f32 1.0, %v189
  %v191 = vmul.f32 %v188, %v190
  %v192 = vadd.f32 %v188, %v191
  %vm193 = vweird.f32 %v186
  %vm194 = vweird.f32 %v188
  %vm195 = vmor %vm193, %vm194
  %v196 = vsel %vm195, %v188, %v192
  %v197 = vand.u32 2147483647, %v186
  %vm198 = vcmp.eq.f32.partialorder %v197, 8.507059e+37
  %v199 = vand.u32 %v186, 2147483648
  %v200 = vor.u32 1.1754944e-38, %v199
  %v201 = vsel %vm198, %v200, %v196
  %v202 = vmul.f32 1.0, %v201
  %v203 = vrcp.pop %v187
  %v204 = vmul.f32 %v187, %v203
  %v205 = vsub.f32 1.0, %v204
  %v206 = vmul.f32 %v203, %v205
  %v207 = vadd.f32 %v203, %v206
  %vm208 = vweird.f32 %v187
  %vm209 = vweird.f32 %v203
  %vm210 = vmor %vm208, %vm209
  %v211 = vsel %vm210, %v203, %v207
  %v212 = vand.u32 2147483647, %v187
  %vm213 = vcmp.eq.f32.partialorder %v212, 8.507059e+37
  %v214 = vand.u32 %v187, 2147483648
  %v215 = vor.u32 1.1754944e-38, %v214
  %v216 = vsel %vm213, %v215, %v211
  %v217 = vmul.f32 1.0, %v216
  %v218 = vsel %vm179, %v202, %v173
  %v219 = vsel %vm179, %v217, %v175
  %vm220 = vcmask 64512
  %221 = vst.msk [vmem:[%s7] sm:$0xff] %vm220, %v218
  %222 = vst.msk [vmem:[%s7 + $0x8] sm:$0xff] %vm220, %v219
  // Predicated region
  $region30: #{neural_network_forward.1} parent=0 // pred_check
    _
  $region31: #{neural_network_forward.1} parent=0 // pred_check_branch
    %224 = sbr.rel (0) target = $region33
  $region32: #{neural_network_forward.1} parent=0 // pred_region
    _
  $region33: #{neural_network_forward.1} parent=0 // pred_fallthru
    _
  // Predicated region
  $region34: #{neural_network_forward.1} parent=0 // pred_check
    _
  $region35: #{neural_network_forward.1} parent=0 // pred_check_branch
    %226 = sbr.rel (0) target = $region37
  $region36: #{neural_network_forward.1} parent=0 // pred_region
    _
  $region37: #{neural_network_forward.1} parent=0 // pred_fallthru
    _

</llo_original>
